<compile_context>
chip_gen: v5e
topology: v5e:2x2
jax: 0.10.0
libtpu: 0.0.40
codegen_flags: <defaults>
</compile_context>

<pallas_src>
import jax
import jax.numpy as jnp
from jax.experimental import pallas as pl
from jax.experimental.pallas import tpu as pltpu


def _round_up(x: int, m: int) -> int:
    return (x + m - 1) // m * m


def sysmodel_kernel(xa_ref, w1_ref, b1_ref, w2_ref, b2_ref, w3_ref, b3_ref, o_ref):
    """One batch tile of the fused 3-layer MLP.

    xa_ref : (TB, S+A)            concatenated [state, action] tile (compute dtype)
    w1_ref : (S+A, F1P)  b1_ref : (1, F1P) f32
    w2_ref : (F1P, F2P)  b2_ref : (1, F2P) f32
    w3_ref : (F2P, OUTP) b3_ref : (1, OUTP) f32
    o_ref  : (TB, OUTP)           lane-dense output tile (OUTP = 128-multiple)
    """
    # Layer 1: single merged dot (no split-K), f32 accumulate, f32 bias/ReLU.
    h1 = jnp.dot(xa_ref[...], w1_ref[...],
                 preferred_element_type=jnp.float32) + b1_ref[...]
    h1 = jnp.maximum(h1, 0.0)

    # Layer 2: Linear + ReLU (cast activation to the MXU compute dtype only).
    h2 = jnp.dot(h1.astype(w2_ref.dtype), w2_ref[...],
                 preferred_element_type=jnp.float32) + b2_ref[...]
    h2 = jnp.maximum(h2, 0.0)

    # Layer 3: Linear (no activation), lane-dense store.
    out = jnp.dot(h2.astype(w3_ref.dtype), w3_ref[...],
                  preferred_element_type=jnp.float32) + b3_ref[...]
    o_ref[...] = out.astype(o_ref.dtype)


def prepare_params(params, compute_dtype=jnp.bfloat16):
    """One-time layout prep (call OUTSIDE the hot path).

    * Transpose PyTorch-layout (out, in) weights to (in, out).
    * Zero-pad every matmul N dim / output lane dim to a 128-multiple
      (400->512, 300->384, 24->128).  Zero padding is numerically exact
      (ReLU(0)=0, zero rows/cols contribute nothing).
    * Weights cast to `compute_dtype` (bf16 = native MXU fast path on all
      generations); biases stay in f32 so bias-add / ReLU remain f32.
    """
    w1, b1, w2, b2, w3, b3 = params
    F1, F2, OUT = w1.shape[0], w2.shape[0], w3.shape[0]
    F1P, F2P, OUTP = _round_up(F1, 128), _round_up(F2, 128), _round_up(OUT, 128)

    w1p = jnp.pad(w1.T, ((0, 0), (0, F1P - F1))).astype(compute_dtype)
    b1p = jnp.pad(b1, (0, F1P - F1)).astype(jnp.float32)[None, :]
    w2p = jnp.pad(w2.T, ((0, F1P - F1), (0, F2P - F2))).astype(compute_dtype)
    b2p = jnp.pad(b2, (0, F2P - F2)).astype(jnp.float32)[None, :]
    w3p = jnp.pad(w3.T, ((0, F2P - F2), (0, OUTP - OUT))).astype(compute_dtype)
    b3p = jnp.pad(b3, (0, OUTP - OUT)).astype(jnp.float32)[None, :]

    return (w1p, b1p, w2p, b2p, w3p, b3p)


def _choose_tile(batch, block_b, min_steps=2):
    """Pick (tile_b, padded_batch).

    Prefers a tile that divides the 8-rounded batch exactly (no activation
    padding) and yields >= min_steps grid steps when batch >= 16 so the
    'parallel' batch axis can shard across v7x's two TensorCores.  Falls back
    to padding when exact tiling would explode the step count.
    """
    b8 = _round_up(batch, 8)
    want = min_steps if b8 >= 8 * min_steps else 1

    # Padded candidate.
    tb_pad = min(block_b, b8)
    if want > 1:
        tb_pad = min(tb_pad, _round_up(-(-b8 // want), 8))
    b_pad = _round_up(b8, tb_pad)
    steps_pad = b_pad // tb_pad

    # Exact-divisor candidate (largest tile <= block_b, multiple of 8).
    for t in range(min(block_b, b8), 7, -8):
        if b8 % t == 0 and b8 // t >= want:
            if b8 // t <= 2 * steps_pad:   # don't trade padding for many tiny steps
                return t, b8
            break
    return tb_pad, b_pad


def sysmodel_forward(state, action, prepared, state_size, *,
                     block_b=256, out_dtype=jnp.float32):
    """state: (B, S), action: (B, A), prepared = prepare_params(params).
    Returns predicted next state (B, state_size) in `out_dtype`."""
    w1, b1, w2, b2, w3, b3 = prepared
    compute_dtype = w1.dtype
    B = state.shape[0]
    K = state.shape[1] + action.shape[1]
    F1P, F2P, OUTP = w1.shape[1], w2.shape[1], w3.shape[1]

    # Single concat in the wrapper (tiny fused XLA op) -> one merged layer-1 dot
    # in the kernel; cast once so the DMA'd activation slab is already bf16.
    xa = jnp.concatenate([state, action], axis=1).astype(compute_dtype)

    tb, b_pad = _choose_tile(B, block_b)
    if b_pad != B:
        xa = jnp.pad(xa, ((0, b_pad - B), (0, 0)))

    grid = (b_pad // tb,)
    out = pl.pallas_call(
        sysmodel_kernel,
        out_shape=jax.ShapeDtypeStruct((b_pad, OUTP), out_dtype),
        grid=grid,
        in_specs=[
            # Activations: tiled over batch (double-buffered by the pipeline).
            pl.BlockSpec((tb, K), lambda i: (i, 0)),
            # Weights/biases: constant block index -> fetched once, VMEM-resident.
            pl.BlockSpec((K, F1P), lambda i: (0, 0)),
            pl.BlockSpec((1, F1P), lambda i: (0, 0)),
            pl.BlockSpec((F1P, F2P), lambda i: (0, 0)),
            pl.BlockSpec((1, F2P), lambda i: (0, 0)),
            pl.BlockSpec((F2P, OUTP), lambda i: (0, 0)),
            pl.BlockSpec((1, OUTP), lambda i: (0, 0)),
        ],
        out_specs=pl.BlockSpec((tb, OUTP), lambda i: (i, 0)),
        compiler_params=pltpu.CompilerParams(
            dimension_semantics=("parallel",)),  # shards batch across v7x's 2 TCs
    )(xa, w1, b1, w2, b2, w3, b3)

    # Slice back to the logical shape. If the consumer runs under the same jit,
    # it can instead consume the lane-padded (b_pad, OUTP) slab directly and
    # fuse this slice away.
    return out[:B, :state_size]


def init_params(key, state_size, action_size, fc1_units=400, fc2_units=300,
                dtype=jnp.float32):
    """Deterministic init mirroring PyTorch nn.Linear default:
    U(-1/sqrt(fan_in), 1/sqrt(fan_in)) for both weight and bias (PyTorch layout)."""
    def linear_init(k, fan_in, fan_out):
        kw, kb = jax.random.split(k)
        bound = 1.0 / jnp.sqrt(jnp.asarray(fan_in, dtype))
        w = jax.random.uniform(kw, (fan_out, fan_in), dtype, -bound, bound)
        b = jax.random.uniform(kb, (fan_out,), dtype, -bound, bound)
        return w, b

    k1, k2, k3 = jax.random.split(key, 3)
    w1, b1 = linear_init(k1, state_size + action_size, fc1_units)
    w2, b2 = linear_init(k2, fc1_units, fc2_units)
    w3, b3 = linear_init(k3, fc2_units, state_size)
    return (w1, b1, w2, b2, w3, b3)


def reference_forward(state, action, params):
    """Pure-JAX reference (PyTorch-layout params) for correctness check."""
    w1, b1, w2, b2, w3, b3 = params
    xa = jnp.concatenate([state, action], axis=1)
    x1 = jnp.maximum(xa @ w1.T + b1, 0.0)
    x1 = jnp.maximum(x1 @ w2.T + b2, 0.0)
    return x1 @ w3.T + b3


if __name__ == "__main__":
    # BipedalWalker-like sizes: state=24, action=4, batch=8.
    STATE_SIZE, ACTION_SIZE, BATCH = 24, 4, 8

    key = jax.random.PRNGKey(0)
    kp, ks, ka = jax.random.split(key, 3)

    params = init_params(kp, STATE_SIZE, ACTION_SIZE)
    state = jax.random.normal(ks, (BATCH, STATE_SIZE), jnp.float32)
    action = jax.random.normal(ka, (BATCH, ACTION_SIZE), jnp.float32)

    ref = reference_forward(state, action, params)

    # Exact-path check (f32 weights): tight tolerance.
    prep_f32 = prepare_params(params, compute_dtype=jnp.float32)
    out_f32 = jax.block_until_ready(
        sysmodel_forward(state, action, prep_f32, STATE_SIZE))
    assert out_f32.shape == (BATCH, STATE_SIZE), out_f32.shape
    assert jnp.allclose(out_f32, ref, atol=1e-4, rtol=1e-4), "f32 mismatch vs reference"

    # Fast-path (default bf16 weights, MXU native): relaxed tolerance.
    prep_bf16 = prepare_params(params)
    out_bf16 = jax.block_until_ready(
        sysmodel_forward(state, action, prep_bf16, STATE_SIZE))
    assert out_bf16.shape == (BATCH, STATE_SIZE), out_bf16.shape
    assert jnp.allclose(out_bf16, ref, atol=5e-2, rtol=5e-2), "bf16 mismatch vs reference"

    print("KERNEL_OK")
</pallas_src>

<mosaic_0001>
module attributes {stable_mosaic.version = 11 : i64} {
  func.func @sysmodel_kernel(%arg0: i32, %arg1: memref<8x28xf32, #tpu.memory_space<vmem>>, %arg2: memref<28x512xf32, #tpu.memory_space<vmem>>, %arg3: memref<1x512xf32, #tpu.memory_space<vmem>>, %arg4: memref<512x384xf32, #tpu.memory_space<vmem>>, %arg5: memref<1x384xf32, #tpu.memory_space<vmem>>, %arg6: memref<384x128xf32, #tpu.memory_space<vmem>>, %arg7: memref<1x128xf32, #tpu.memory_space<vmem>>, %arg8: memref<8x128xf32, #tpu.memory_space<vmem>>) attributes {dimension_semantics = [#tpu.dimension_semantics<parallel>], iteration_bounds = array<i64: 1>, scalar_prefetch = 0 : i64, scratch_operands = 0 : i64, tpu.core_type = #tpu.core_type<tc>, window_params = [{transform_indices = @transform_0, window_bounds = array<i64: 8, 28>}, {pipeline_mode = #tpu.pipeline_mode<synchronous>, transform_indices = @transform_1, window_bounds = array<i64: 28, 512>}, {pipeline_mode = #tpu.pipeline_mode<synchronous>, transform_indices = @transform_2, window_bounds = array<i64: 1, 512>}, {pipeline_mode = #tpu.pipeline_mode<synchronous>, transform_indices = @transform_3, window_bounds = array<i64: 512, 384>}, {pipeline_mode = #tpu.pipeline_mode<synchronous>, transform_indices = @transform_4, window_bounds = array<i64: 1, 384>}, {pipeline_mode = #tpu.pipeline_mode<synchronous>, transform_indices = @transform_5, window_bounds = array<i64: 384, 128>}, {pipeline_mode = #tpu.pipeline_mode<synchronous>, transform_indices = @transform_6, window_bounds = array<i64: 1, 128>}, {transform_indices = @transform_7, window_bounds = array<i64: 8, 128>}]} {
    %c0 = arith.constant 0 : index
    %c0_0 = arith.constant 0 : index
    %0 = vector.load %arg1[%c0, %c0_0] : memref<8x28xf32, #tpu.memory_space<vmem>>, vector<8x28xf32>
    %c0_1 = arith.constant 0 : index
    %c0_2 = arith.constant 0 : index
    %1 = vector.load %arg2[%c0_1, %c0_2] : memref<28x512xf32, #tpu.memory_space<vmem>>, vector<28x512xf32>
    %cst = arith.constant dense<0.000000e+00> : vector<8x512xf32>
    %2 = tpu.matmul %0, %1, %cst {dimension_numbers = #tpu.dot_dimension_numbers<[1], [0], [0], [1], [0, 0, 1, 1], [], []>} : vector<8x28xf32>, vector<28x512xf32>, vector<8x512xf32> -> vector<8x512xf32>
    %c0_3 = arith.constant 0 : index
    %c0_4 = arith.constant 0 : index
    %3 = vector.load %arg3[%c0_3, %c0_4] : memref<1x512xf32, #tpu.memory_space<vmem>>, vector<1x512xf32>
    %4 = vector.broadcast %3 : vector<1x512xf32> to vector<8x512xf32>
    %5 = arith.addf %2, %4 : vector<8x512xf32>
    %cst_5 = arith.constant 0.000000e+00 : f32
    %6 = vector.broadcast %cst_5 : f32 to vector<8x512xf32>
    %7 = arith.maximumf %5, %6 : vector<8x512xf32>
    %c0_6 = arith.constant 0 : index
    %c0_7 = arith.constant 0 : index
    %8 = vector.load %arg4[%c0_6, %c0_7] : memref<512x384xf32, #tpu.memory_space<vmem>>, vector<512x384xf32>
    %cst_8 = arith.constant dense<0.000000e+00> : vector<8x384xf32>
    %9 = tpu.matmul %7, %8, %cst_8 {dimension_numbers = #tpu.dot_dimension_numbers<[1], [0], [0], [1], [0, 0, 1, 1], [], []>} : vector<8x512xf32>, vector<512x384xf32>, vector<8x384xf32> -> vector<8x384xf32>
    %c0_9 = arith.constant 0 : index
    %c0_10 = arith.constant 0 : index
    %10 = vector.load %arg5[%c0_9, %c0_10] : memref<1x384xf32, #tpu.memory_space<vmem>>, vector<1x384xf32>
    %11 = vector.broadcast %10 : vector<1x384xf32> to vector<8x384xf32>
    %12 = arith.addf %9, %11 : vector<8x384xf32>
    %cst_11 = arith.constant 0.000000e+00 : f32
    %13 = vector.broadcast %cst_11 : f32 to vector<8x384xf32>
    %14 = arith.maximumf %12, %13 : vector<8x384xf32>
    %c0_12 = arith.constant 0 : index
    %c0_13 = arith.constant 0 : index
    %15 = vector.load %arg6[%c0_12, %c0_13] : memref<384x128xf32, #tpu.memory_space<vmem>>, vector<384x128xf32>
    %cst_14 = arith.constant dense<0.000000e+00> : vector<8x128xf32>
    %16 = tpu.matmul %14, %15, %cst_14 {dimension_numbers = #tpu.dot_dimension_numbers<[1], [0], [0], [1], [0, 0, 1, 1], [], []>} : vector<8x384xf32>, vector<384x128xf32>, vector<8x128xf32> -> vector<8x128xf32>
    %c0_15 = arith.constant 0 : index
    %c0_16 = arith.constant 0 : index
    %17 = vector.load %arg7[%c0_15, %c0_16] : memref<1x128xf32, #tpu.memory_space<vmem>>, vector<1x128xf32>
    %18 = vector.broadcast %17 : vector<1x128xf32> to vector<8x128xf32>
    %19 = arith.addf %16, %18 : vector<8x128xf32>
    %c0_17 = arith.constant 0 : index
    %c0_18 = arith.constant 0 : index
    %20 = vector.load %arg8[%c0_17, %c0_18] : memref<8x128xf32, #tpu.memory_space<vmem>>, vector<8x128xf32>
    tpu.vector_store %arg8[%c0_17, %c0_18], %19 {strides = array<i32>} : memref<8x128xf32, #tpu.memory_space<vmem>>, vector<8x128xf32>,
    return
  }
  func.func @transform_0(%arg0: i32) -> (i32, i32) {
    %c0_i32 = arith.constant 0 : i32
    %c0_i32_0 = arith.constant 0 : i32
    return %arg0, %c0_i32 : i32, i32
  }
  func.func @transform_1(%arg0: i32) -> (i32, i32) {
    %c0_i32 = arith.constant 0 : i32
    %c0_i32_0 = arith.constant 0 : i32
    %c0_i32_1 = arith.constant 0 : i32
    return %c0_i32, %c0_i32_0 : i32, i32
  }
  func.func @transform_2(%arg0: i32) -> (i32, i32) {
    %c0_i32 = arith.constant 0 : i32
    %c0_i32_0 = arith.constant 0 : i32
    %c0_i32_1 = arith.constant 0 : i32
    return %c0_i32, %c0_i32_0 : i32, i32
  }
  func.func @transform_3(%arg0: i32) -> (i32, i32) {
    %c0_i32 = arith.constant 0 : i32
    %c0_i32_0 = arith.constant 0 : i32
    %c0_i32_1 = arith.constant 0 : i32
    return %c0_i32, %c0_i32_0 : i32, i32
  }
  func.func @transform_4(%arg0: i32) -> (i32, i32) {
    %c0_i32 = arith.constant 0 : i32
    %c0_i32_0 = arith.constant 0 : i32
    %c0_i32_1 = arith.constant 0 : i32
    return %c0_i32, %c0_i32_0 : i32, i32
  }
  func.func @transform_5(%arg0: i32) -> (i32, i32) {
    %c0_i32 = arith.constant 0 : i32
    %c0_i32_0 = arith.constant 0 : i32
    %c0_i32_1 = arith.constant 0 : i32
    return %c0_i32, %c0_i32_0 : i32, i32
  }
  func.func @transform_6(%arg0: i32) -> (i32, i32) {
    %c0_i32 = arith.constant 0 : i32
    %c0_i32_0 = arith.constant 0 : i32
    %c0_i32_1 = arith.constant 0 : i32
    return %c0_i32, %c0_i32_0 : i32, i32
  }
  func.func @transform_7(%arg0: i32) -> (i32, i32) {
    %c0_i32 = arith.constant 0 : i32
    %c0_i32_0 = arith.constant 0 : i32
    return %arg0, %c0_i32 : i32, i32
  }
}

</mosaic_0001>

<llo_original>
// kernel: tpu_custom_call.1
$region0: #{tpu_custom_call.1}
  #allocation0 [shape = 'u32[]', space=smem, size = 0x4, offset = 0x4, fixed_abs, tag = 'smem constant byte address 0x4 - core index']
  #allocation1 [shape = 'u32[72,128]{1,0:T(1,128)}', space=vmem, size = 0x9000, scoped, tag = 'internal scratch']
  %s0 = inlined_call_operand.hbm [shape: f32[8,28], index: 0, kind: input, shape index: {}]
  %s1 = inlined_call_operand.hbm [shape: f32[28,512], index: 1, kind: input, shape index: {}]
  %s2 = inlined_call_operand.hbm [shape: f32[1,512], index: 2, kind: input, shape index: {}]
  %s3 = inlined_call_operand.hbm [shape: f32[512,384], index: 3, kind: input, shape index: {}]
  %s4 = inlined_call_operand.vmem [shape: f32[1,384], index: 4, kind: input, shape index: {}]
  %s5 = inlined_call_operand.hbm [shape: f32[384,128], index: 5, kind: input, shape index: {}]
  %s6 = inlined_call_operand.vmem [shape: f32[1,128], index: 6, kind: input, shape index: {}]
  %s7 = inlined_call_operand.hbm [shape: f32[8,128], index: 7, kind: output, shape index: {}]
  %s8 = sld [smem:[#allocation0]]
  $region58: #{tpu_custom_call.1} parent=0
    _
  %s10 = ssub.s32 1, %s8
  %s11 = scalar_select 0, %s10, %s8
  $region1: #{tpu_custom_call.1} parent=0
    #allocation2 [shape = 'u8[4096]{0}', space=vmem, size = 0x1000, scoped, tag = 'input window, operand 0, single buffered']
    #allocation3 [shape = 's32[1]{0}', space=sflag, size = 0x4, scoped, tag = 'scoped memory for tpu_custom_call.1']
    #allocation4 [shape = 's32[1]{0}', space=sflag, size = 0x4, scoped, tag = 'scoped memory for tpu_custom_call.1']
    #allocation5 [shape = 'u8[65536]{0}', space=vmem, size = 0x10000, scoped, tag = 'input window, operand 1, single buffered']
    #allocation6 [shape = 's32[1]{0}', space=sflag, size = 0x4, scoped, tag = 'scoped memory for tpu_custom_call.1']
    #allocation7 [shape = 'u8[2048]{0}', space=vmem, size = 0x800, scoped, tag = 'input window, operand 2, single buffered']
    #allocation8 [shape = 'u8[786432]{0}', space=vmem, size = 0xc0000, scoped, tag = 'input window, operand 3, single buffered']
    #allocation9 [shape = 's32[1]{0}', space=sflag, size = 0x4, scoped, tag = 'scoped memory for tpu_custom_call.1']
    #allocation10 [shape = 'u8[196608]{0}', space=vmem, size = 0x30000, scoped, tag = 'input window, operand 5, single buffered']
    #allocation11 [shape = 'u8[4096]{0}', space=vmem, size = 0x1000, scoped, tag = 'output window, operand 0, single buffered']
    %12 = vsyncpa [#allocation3], 0
    %13 = vsyncpa [#allocation6], 0
    %14 = vsyncpa [#allocation9], 0
    %15 = vsyncpa [#allocation4], 0
    // Predicated region
    $region2: #{tpu_custom_call.1} parent=1 // pred_check
      _
    $region3: #{tpu_custom_call.1} parent=1 // pred_check_branch
      %17 = sbr.rel (0) target = $region5
    $region4: #{tpu_custom_call.1} parent=1 // pred_region
      %19 = vsyncadd [#allocation3], 0
      %s21 = sshll.u32 %s0, 4
      %s22 = int_to_ptr.hbm [resolvable:$true] %s21
      %s23 = sshll.u32 [#allocation2], 4
      %s24 = int_to_ptr.vmem [resolvable:$true] %s23
      %26 = dma.hbm_to_vmem [thread:$0]  %s22, 128, %s24, [#allocation3]
    $region5: #{tpu_custom_call.1} parent=1 // pred_fallthru
      _
    // Predicated region
    $region6: #{tpu_custom_call.1} parent=1 // pred_check
      _
    $region7: #{tpu_custom_call.1} parent=1 // pred_check_branch
      %28 = sbr.rel (0) target = $region9
    $region8: #{tpu_custom_call.1} parent=1 // pred_region
      %30 = vsyncadd [#allocation6], 0
      %s31 = sshll.u32 %s1, 4
      %s32 = int_to_ptr.hbm [resolvable:$true] %s31
      %s33 = sshll.u32 [#allocation5], 4
      %s34 = int_to_ptr.vmem [resolvable:$true] %s33
      %39 = dma.hbm_to_vmem [thread:$0]  %s32, 2048, %s34, [#allocation6], 512, 512, 32
    $region9: #{tpu_custom_call.1} parent=1 // pred_fallthru
      _
    // Predicated region
    $region10: #{tpu_custom_call.1} parent=1 // pred_check
      _
    $region11: #{tpu_custom_call.1} parent=1 // pred_check_branch
      %41 = sbr.rel (0) target = $region13
    $region12: #{tpu_custom_call.1} parent=1 // pred_region
      %43 = vsyncadd [#allocation6], 0
      %s45 = sshll.u32 %s2, 4
      %s46 = int_to_ptr.hbm [resolvable:$true] %s45
      %s47 = sshll.u32 [#allocation7], 4
      %s48 = int_to_ptr.vmem [resolvable:$true] %s47
      %50 = dma.hbm_to_vmem [thread:$0]  %s46, 64, %s48, [#allocation6]
    $region13: #{tpu_custom_call.1} parent=1 // pred_fallthru
      _
    // Predicated region
    $region14: #{tpu_custom_call.1} parent=1 // pred_check
      _
    $region15: #{tpu_custom_call.1} parent=1 // pred_check_branch
      %52 = sbr.rel (0) target = $region17
    $region16: #{tpu_custom_call.1} parent=1 // pred_region
      %54 = vsyncadd [#allocation9], 0
      %s55 = sshll.u32 %s3, 4
      %s56 = int_to_ptr.hbm [resolvable:$true] %s55
      %s57 = sshll.u32 [#allocation8], 4
      %s58 = int_to_ptr.vmem [resolvable:$true] %s57
      %63 = dma.hbm_to_vmem [thread:$0]  %s56, 24576, %s58, [#allocation9], 384, 384, 24
    $region17: #{tpu_custom_call.1} parent=1 // pred_fallthru
      _
    // Predicated region
    $region18: #{tpu_custom_call.1} parent=1 // pred_check
      _
    $region19: #{tpu_custom_call.1} parent=1 // pred_check_branch
      %65 = sbr.rel (0) target = $region21
    $region20: #{tpu_custom_call.1} parent=1 // pred_region
      _
    $region21: #{tpu_custom_call.1} parent=1 // pred_fallthru
      _
    // Predicated region
    $region22: #{tpu_custom_call.1} parent=1 // pred_check
      _
    $region23: #{tpu_custom_call.1} parent=1 // pred_check_branch
      %67 = sbr.rel (0) target = $region25
    $region24: #{tpu_custom_call.1} parent=1 // pred_region
      %69 = vsyncadd [#allocation9], 0
      %s70 = sshll.u32 %s5, 4
      %s71 = int_to_ptr.hbm [resolvable:$true] %s70
      %s72 = sshll.u32 [#allocation10], 4
      %s73 = int_to_ptr.vmem [resolvable:$true] %s72
      %78 = dma.hbm_to_vmem [thread:$0]  %s71, 6144, %s73, [#allocation9], 128, 128, 8
    $region25: #{tpu_custom_call.1} parent=1 // pred_fallthru
      _
    // Predicated region
    $region26: #{tpu_custom_call.1} parent=1 // pred_check
      _
    $region27: #{tpu_custom_call.1} parent=1 // pred_check_branch
      %80 = sbr.rel (0) target = $region29
    $region28: #{tpu_custom_call.1} parent=1 // pred_region
      _
    $region29: #{tpu_custom_call.1} parent=1 // pred_fallthru
      _
    // Predicated region
    $region30: #{tpu_custom_call.1} parent=1 // pred_check
      _
    $region31: #{tpu_custom_call.1} parent=1 // pred_check_branch
      %82 = sbr.rel (0) target = $region33
    $region32: #{tpu_custom_call.1} parent=1 // pred_region
      %84 = dma.done [#allocation3], 128
    $region33: #{tpu_custom_call.1} parent=1 // pred_fallthru
      _
    // Predicated region
    $region34: #{tpu_custom_call.1} parent=1 // pred_check
      _
    $region35: #{tpu_custom_call.1} parent=1 // pred_check_branch
      %86 = sbr.rel (0) target = $region37
    $region36: #{tpu_custom_call.1} parent=1 // pred_region
      %88 = dma.done [#allocation6], 2048
    $region37: #{tpu_custom_call.1} parent=1 // pred_fallthru
      _
    // Predicated region
    $region38: #{tpu_custom_call.1} parent=1 // pred_check
      _
    $region39: #{tpu_custom_call.1} parent=1 // pred_check_branch
      %90 = sbr.rel (0) target = $region41
    $region40: #{tpu_custom_call.1} parent=1 // pred_region
      %92 = dma.done [#allocation6], 64
    $region41: #{tpu_custom_call.1} parent=1 // pred_fallthru
      _
    // Predicated region
    $region42: #{tpu_custom_call.1} parent=1 // pred_check
      _
    $region43: #{tpu_custom_call.1} parent=1 // pred_check_branch
      %94 = sbr.rel (0) target = $region45
    $region44: #{tpu_custom_call.1} parent=1 // pred_region
      %96 = dma.done [#allocation9], 24576
    $region45: #{tpu_custom_call.1} parent=1 // pred_fallthru
      _
    // Predicated region
    $region46: #{tpu_custom_call.1} parent=1 // pred_check
      _
    $region47: #{tpu_custom_call.1} parent=1 // pred_check_branch
      %98 = sbr.rel (0) target = $region49
    $region48: #{tpu_custom_call.1} parent=1 // pred_region
      %100 = dma.done [#allocation9], 6144
    $region49: #{tpu_custom_call.1} parent=1 // pred_fallthru
      _
    %v101 = vld [vmem:[#allocation2] sm:$0xff]
    %v102 = vld [vmem:[#allocation5] sm:$0xff]
    %v103 = vld [vmem:[#allocation5 + $0x8] sm:$0xff]
    %v104 = vld [vmem:[#allocation5 + $0x10] sm:$0xff]
    %v105 = vld [vmem:[#allocation5 + $0x18] sm:$0xff]
    %v106 = vld [vmem:[#allocation5 + $0x20] sm:$0xff]
    %v107 = vld [vmem:[#allocation5 + $0x28] sm:$0xff]
    %v108 = vld [vmem:[#allocation5 + $0x30] sm:$0xff]
    %v109 = vld [vmem:[#allocation5 + $0x38] sm:$0xff]
    %v110 = vld [vmem:[#allocation5 + $0x40] sm:$0xff]
    %v111 = vld [vmem:[#allocation5 + $0x48] sm:$0xff]
    %v112 = vld [vmem:[#allocation5 + $0x50] sm:$0xff]
    %v113 = vld [vmem:[#allocation5 + $0x58] sm:$0xff]
    %v114 = vld [vmem:[#allocation5 + $0x60] sm:$0xf]
    %v115 = vld [vmem:[#allocation5 + $0x68] sm:$0xf]
    %v116 = vld [vmem:[#allocation5 + $0x70] sm:$0xf]
    %v117 = vld [vmem:[#allocation5 + $0x78] sm:$0xf]
    %v118 = vld [vmem:[#allocation7] sm:$0xf]
    %v120 = vperm.slane %v118, 0
    %v121 = vperm.slane %v118, 1
    %v122 = vperm.slane %v118, 2
    %v123 = vperm.slane %v118, 3
    %vm128 = vcmask 228352
    %v130 = vsel %vm128, %v101, 0
    %vm132 = vcmask 1043456
    %v134 = vsel %vm132, %v114, 0
    %v137 = vsel %vm132, %v115, 0
    %v140 = vsel %vm132, %v116, 0
    %v143 = vsel %vm132, %v117, 0
    %145 = vmatpush.msra.mxu0 0.0
    %146 = vmatpush.msra.mxu0 0.0
    %147 = vmatpush.msra.mxu0 0.0
    %148 = vmatpush.msra.mxu0 0.0
    %149 = vmatpush.msra.mxu0 0.0
    %150 = vmatpush.msra.mxu0 0.0
    %151 = vmatpush.msra.mxu0 0.0
    %152 = vmatpush.msra.mxu0 0.0
    %153 = vmatpush.msra.mxu0 0.0
    %154 = vmatpush.msra.mxu0 0.0
    %155 = vmatpush.msra.mxu0 0.0
    %156 = vmatpush.msra.mxu0 0.0
    %157 = vmatpush.msra.mxu0 %v134
    %158 = vmatpush.msra.mxu0 %v110
    %159 = vmatpush.msra.mxu0 %v106
    %160 = vmatpush.msra.mxu0 %v102
    %161 = vmatmul.f32.gmra.mxu0 %v130
    %v162 = vpop.f32.mrf.mxu0
    %v163 = vadd.f32 %v120, %v162
    %164 = vdwg.mxu0
    %165 = vmatpush.msra.mxu0 0.0
    %166 = vmatpush.msra.mxu0 0.0
    %167 = vmatpush.msra.mxu0 0.0
    %168 = vmatpush.msra.mxu0 0.0
    %169 = vmatpush.msra.mxu0 0.0
    %170 = vmatpush.msra.mxu0 0.0
    %171 = vmatpush.msra.mxu0 0.0
    %172 = vmatpush.msra.mxu0 0.0
    %173 = vmatpush.msra.mxu0 0.0
    %174 = vmatpush.msra.mxu0 0.0
    %175 = vmatpush.msra.mxu0 0.0
    %176 = vmatpush.msra.mxu0 0.0
    %177 = vmatpush.msra.mxu0 %v137
    %178 = vmatpush.msra.mxu0 %v111
    %179 = vmatpush.msra.mxu0 %v107
    %180 = vmatpush.msra.mxu0 %v103
    %181 = vmatmul.f32.gmra.mxu0 %v130
    %v182 = vpop.f32.mrf.mxu0
    %v183 = vadd.f32 %v121, %v182
    %184 = vdwg.mxu0
    %185 = vmatpush.msra.mxu0 0.0
    %186 = vmatpush.msra.mxu0 0.0
    %187 = vmatpush.msra.mxu0 0.0
    %188 = vmatpush.msra.mxu0 0.0
    %189 = vmatpush.msra.mxu0 0.0
    %190 = vmatpush.msra.mxu0 0.0
    %191 = vmatpush.msra.mxu0 0.0
    %192 = vmatpush.msra.mxu0 0.0
    %193 = vmatpush.msra.mxu0 0.0
    %194 = vmatpush.msra.mxu0 0.0
    %195 = vmatpush.msra.mxu0 0.0
    %196 = vmatpush.msra.mxu0 0.0
    %197 = vmatpush.msra.mxu0 %v140
    %198 = vmatpush.msra.mxu0 %v112
    %199 = vmatpush.msra.mxu0 %v108
    %200 = vmatpush.msra.mxu0 %v104
    %201 = vmatmul.f32.gmra.mxu0 %v130
    %v202 = vpop.f32.mrf.mxu0
    %v203 = vadd.f32 %v122, %v202
    %204 = vdwg.mxu0
    %205 = vmatpush.msra.mxu0 0.0
    %206 = vmatpush.msra.mxu0 0.0
    %207 = vmatpush.msra.mxu0 0.0
    %208 = vmatpush.msra.mxu0 0.0
    %209 = vmatpush.msra.mxu0 0.0
    %210 = vmatpush.msra.mxu0 0.0
    %211 = vmatpush.msra.mxu0 0.0
    %212 = vmatpush.msra.mxu0 0.0
    %213 = vmatpush.msra.mxu0 0.0
    %214 = vmatpush.msra.mxu0 0.0
    %215 = vmatpush.msra.mxu0 0.0
    %216 = vmatpush.msra.mxu0 0.0
    %217 = vmatpush.msra.mxu0 %v143
    %218 = vmatpush.msra.mxu0 %v113
    %219 = vmatpush.msra.mxu0 %v109
    %220 = vmatpush.msra.mxu0 %v105
    %221 = vmatmul.f32.gmra.mxu0 %v130
    %v222 = vpop.f32.mrf.mxu0
    %v223 = vadd.f32 %v123, %v222
    %224 = vdwg.mxu0
    %v225 = vmax.f32 %v163, 0.0
    %v226 = vmax.f32 %v183, 0.0
    %v227 = vmax.f32 %v203, 0.0
    %v228 = vmax.f32 %v223, 0.0
    %v229 = vld [vmem:[#allocation8] sm:$0xff]
    %v230 = vld [vmem:[#allocation8 + $0x8] sm:$0xff]
    %v231 = vld [vmem:[#allocation8 + $0x10] sm:$0xff]
    %v232 = vld [vmem:[#allocation8 + $0x18] sm:$0xff]
    %v233 = vld [vmem:[#allocation8 + $0x20] sm:$0xff]
    %v234 = vld [vmem:[#allocation8 + $0x28] sm:$0xff]
    %v235 = vld [vmem:[#allocation8 + $0x30] sm:$0xff]
    %v236 = vld [vmem:[#allocation8 + $0x38] sm:$0xff]
    %v237 = vld [vmem:[#allocation8 + $0x40] sm:$0xff]
    %v238 = vld [vmem:[#allocation8 + $0x48] sm:$0xff]
    %v239 = vld [vmem:[#allocation8 + $0x50] sm:$0xff]
    %v240 = vld [vmem:[#allocation8 + $0x58] sm:$0xff]
    %v241 = vld [vmem:[#allocation8 + $0x60] sm:$0xff]
    %v242 = vld [vmem:[#allocation8 + $0x68] sm:$0xff]
    %v243 = vld [vmem:[#allocation8 + $0x70] sm:$0xff]
    %v244 = vld [vmem:[#allocation8 + $0x78] sm:$0xff]
    %v245 = vld [vmem:[#allocation8 + $0x80] sm:$0xff]
    %v246 = vld [vmem:[#allocation8 + $0x88] sm:$0xff]
    %v247 = vld [vmem:[#allocation8 + $0x90] sm:$0xff]
    %v248 = vld [vmem:[#allocation8 + $0x98] sm:$0xff]
    %v249 = vld [vmem:[#allocation8 + $0xa0] sm:$0xff]
    %v250 = vld [vmem:[#allocation8 + $0xa8] sm:$0xff]
    %v251 = vld [vmem:[#allocation8 + $0xb0] sm:$0xff]
    %v252 = vld [vmem:[#allocation8 + $0xb8] sm:$0xff]
    %v253 = vld [vmem:[#allocation8 + $0xc0] sm:$0xff]
    %v254 = vld [vmem:[#allocation8 + $0xc8] sm:$0xff]
    %v255 = vld [vmem:[#allocation8 + $0xd0] sm:$0xff]
    %v256 = vld [vmem:[#allocation8 + $0xd8] sm:$0xff]
    %v257 = vld [vmem:[#allocation8 + $0xe0] sm:$0xff]
    %v258 = vld [vmem:[#allocation8 + $0xe8] sm:$0xff]
    %v259 = vld [vmem:[#allocation8 + $0xf0] sm:$0xff]
    %v260 = vld [vmem:[#allocation8 + $0xf8] sm:$0xff]
    %v261 = vld [vmem:[#allocation8 + $0x100] sm:$0xff]
    %v262 = vld [vmem:[#allocation8 + $0x108] sm:$0xff]
    %v263 = vld [vmem:[#allocation8 + $0x110] sm:$0xff]
    %v264 = vld [vmem:[#allocation8 + $0x118] sm:$0xff]
    %v265 = vld [vmem:[#allocation8 + $0x120] sm:$0xff]
    %v266 = vld [vmem:[#allocation8 + $0x128] sm:$0xff]
    %v267 = vld [vmem:[#allocation8 + $0x130] sm:$0xff]
    %v268 = vld [vmem:[#allocation8 + $0x138] sm:$0xff]
    %v269 = vld [vmem:[#allocation8 + $0x140] sm:$0xff]
    %v270 = vld [vmem:[#allocation8 + $0x148] sm:$0xff]
    %v271 = vld [vmem:[#allocation8 + $0x150] sm:$0xff]
    %v272 = vld [vmem:[#allocation8 + $0x158] sm:$0xff]
    %v273 = vld [vmem:[#allocation8 + $0x160] sm:$0xff]
    %v274 = vld [vmem:[#allocation8 + $0x168] sm:$0xff]
    %v275 = vld [vmem:[#allocation8 + $0x170] sm:$0xff]
    %v276 = vld [vmem:[#allocation8 + $0x178] sm:$0xff]
    %v277 = vld [vmem:[#allocation8 + $0x180] sm:$0xff]
    %v278 = vld [vmem:[#allocation8 + $0x188] sm:$0xff]
    %v279 = vld [vmem:[#allocation8 + $0x190] sm:$0xff]
    %v280 = vld [vmem:[#allocation8 + $0x198] sm:$0xff]
    %v281 = vld [vmem:[#allocation8 + $0x1a0] sm:$0xff]
    %v282 = vld [vmem:[#allocation8 + $0x1a8] sm:$0xff]
    %v283 = vld [vmem:[#allocation8 + $0x1b0] sm:$0xff]
    %v284 = vld [vmem:[#allocation8 + $0x1b8] sm:$0xff]
    %v285 = vld [vmem:[#allocation8 + $0x1c0] sm:$0xff]
    %v286 = vld [vmem:[#allocation8 + $0x1c8] sm:$0xff]
    %v287 = vld [vmem:[#allocation8 + $0x1d0] sm:$0xff]
    %v288 = vld [vmem:[#allocation8 + $0x1d8] sm:$0xff]
    %v289 = vld [vmem:[#allocation8 + $0x1e0] sm:$0xff]
    %v290 = vld [vmem:[#allocation8 + $0x1e8] sm:$0xff]
    %v291 = vld [vmem:[#allocation8 + $0x1f0] sm:$0xff]
    %v292 = vld [vmem:[#allocation8 + $0x1f8] sm:$0xff]
    %v293 = vld [vmem:[#allocation8 + $0x200] sm:$0xff]
    %v294 = vld [vmem:[#allocation8 + $0x208] sm:$0xff]
    %v295 = vld [vmem:[#allocation8 + $0x210] sm:$0xff]
    %v296 = vld [vmem:[#allocation8 + $0x218] sm:$0xff]
    %v297 = vld [vmem:[#allocation8 + $0x220] sm:$0xff]
    %v298 = vld [vmem:[#allocation8 + $0x228] sm:$0xff]
    %v299 = vld [vmem:[#allocation8 + $0x230] sm:$0xff]
    %v300 = vld [vmem:[#allocation8 + $0x238] sm:$0xff]
    %v301 = vld [vmem:[#allocation8 + $0x240] sm:$0xff]
    %v302 = vld [vmem:[#allocation8 + $0x248] sm:$0xff]
    %v303 = vld [vmem:[#allocation8 + $0x250] sm:$0xff]
    %v304 = vld [vmem:[#allocation8 + $0x258] sm:$0xff]
    %v305 = vld [vmem:[#allocation8 + $0x260] sm:$0xff]
    %v306 = vld [vmem:[#allocation8 + $0x268] sm:$0xff]
    %v307 = vld [vmem:[#allocation8 + $0x270] sm:$0xff]
    %v308 = vld [vmem:[#allocation8 + $0x278] sm:$0xff]
    %v309 = vld [vmem:[#allocation8 + $0x280] sm:$0xff]
    %v310 = vld [vmem:[#allocation8 + $0x288] sm:$0xff]
    %v311 = vld [vmem:[#allocation8 + $0x290] sm:$0xff]
    %v312 = vld [vmem:[#allocation8 + $0x298] sm:$0xff]
    %v313 = vld [vmem:[#allocation8 + $0x2a0] sm:$0xff]
    %v314 = vld [vmem:[#allocation8 + $0x2a8] sm:$0xff]
    %v315 = vld [vmem:[#allocation8 + $0x2b0] sm:$0xff]
    %v316 = vld [vmem:[#allocation8 + $0x2b8] sm:$0xff]
    %v317 = vld [vmem:[#allocation8 + $0x2c0] sm:$0xff]
    %v318 = vld [vmem:[#allocation8 + $0x2c8] sm:$0xff]
    %v319 = vld [vmem:[#allocation8 + $0x2d0] sm:$0xff]
    %v320 = vld [vmem:[#allocation8 + $0x2d8] sm:$0xff]
    %v321 = vld [vmem:[#allocation8 + $0x2e0] sm:$0xff]
    %v322 = vld [vmem:[#allocation8 + $0x2e8] sm:$0xff]
    %v323 = vld [vmem:[#allocation8 + $0x2f0] sm:$0xff]
    %v324 = vld [vmem:[#allocation8 + $0x2f8] sm:$0xff]
    %v325 = vld [vmem:[#allocation8 + $0x300] sm:$0xff]
    %v326 = vld [vmem:[#allocation8 + $0x308] sm:$0xff]
    %v327 = vld [vmem:[#allocation8 + $0x310] sm:$0xff]
    %v328 = vld [vmem:[#allocation8 + $0x318] sm:$0xff]
    %v329 = vld [vmem:[#allocation8 + $0x320] sm:$0xff]
    %v330 = vld [vmem:[#allocation8 + $0x328] sm:$0xff]
    %v331 = vld [vmem:[#allocation8 + $0x330] sm:$0xff]
    %v332 = vld [vmem:[#allocation8 + $0x338] sm:$0xff]
    %v333 = vld [vmem:[#allocation8 + $0x340] sm:$0xff]
    %v334 = vld [vmem:[#allocation8 + $0x348] sm:$0xff]
    %v335 = vld [vmem:[#allocation8 + $0x350] sm:$0xff]
    %v336 = vld [vmem:[#allocation8 + $0x358] sm:$0xff]
    %v337 = vld [vmem:[#allocation8 + $0x360] sm:$0xff]
    %v338 = vld [vmem:[#allocation8 + $0x368] sm:$0xff]
    %v339 = vld [vmem:[#allocation8 + $0x370] sm:$0xff]
    %v340 = vld [vmem:[#allocation8 + $0x378] sm:$0xff]
    %v341 = vld [vmem:[#allocation8 + $0x380] sm:$0xff]
    %v342 = vld [vmem:[#allocation8 + $0x388] sm:$0xff]
    %v343 = vld [vmem:[#allocation8 + $0x390] sm:$0xff]
    %v344 = vld [vmem:[#allocation8 + $0x398] sm:$0xff]
    %v345 = vld [vmem:[#allocation8 + $0x3a0] sm:$0xff]
    %v346 = vld [vmem:[#allocation8 + $0x3a8] sm:$0xff]
    %v347 = vld [vmem:[#allocation8 + $0x3b0] sm:$0xff]
    %v348 = vld [vmem:[#allocation8 + $0x3b8] sm:$0xff]
    %v349 = vld [vmem:[#allocation8 + $0x3c0] sm:$0xff]
    %v350 = vld [vmem:[#allocation8 + $0x3c8] sm:$0xff]
    %v351 = vld [vmem:[#allocation8 + $0x3d0] sm:$0xff]
    %v352 = vld [vmem:[#allocation8 + $0x3d8] sm:$0xff]
    %v353 = vld [vmem:[#allocation8 + $0x3e0] sm:$0xff]
    %v354 = vld [vmem:[#allocation8 + $0x3e8] sm:$0xff]
    %v355 = vld [vmem:[#allocation8 + $0x3f0] sm:$0xff]
    %v356 = vld [vmem:[#allocation8 + $0x3f8] sm:$0xff]
    %v357 = vld [vmem:[#allocation8 + $0x400] sm:$0xff]
    %v358 = vld [vmem:[#allocation8 + $0x408] sm:$0xff]
    %v359 = vld [vmem:[#allocation8 + $0x410] sm:$0xff]
    %v360 = vld [vmem:[#allocation8 + $0x418] sm:$0xff]
    %v361 = vld [vmem:[#allocation8 + $0x420] sm:$0xff]
    %v362 = vld [vmem:[#allocation8 + $0x428] sm:$0xff]
    %v363 = vld [vmem:[#allocation8 + $0x430] sm:$0xff]
    %v364 = vld [vmem:[#allocation8 + $0x438] sm:$0xff]
    %v365 = vld [vmem:[#allocation8 + $0x440] sm:$0xff]
    %v366 = vld [vmem:[#allocation8 + $0x448] sm:$0xff]
    %v367 = vld [vmem:[#allocation8 + $0x450] sm:$0xff]
    %v368 = vld [vmem:[#allocation8 + $0x458] sm:$0xff]
    %v369 = vld [vmem:[#allocation8 + $0x460] sm:$0xff]
    %v370 = vld [vmem:[#allocation8 + $0x468] sm:$0xff]
    %v371 = vld [vmem:[#allocation8 + $0x470] sm:$0xff]
    %v372 = vld [vmem:[#allocation8 + $0x478] sm:$0xff]
    %v373 = vld [vmem:[#allocation8 + $0x480] sm:$0xff]
    %v374 = vld [vmem:[#allocation8 + $0x488] sm:$0xff]
    %v375 = vld [vmem:[#allocation8 + $0x490] sm:$0xff]
    %v376 = vld [vmem:[#allocation8 + $0x498] sm:$0xff]
    %v377 = vld [vmem:[#allocation8 + $0x4a0] sm:$0xff]
    %v378 = vld [vmem:[#allocation8 + $0x4a8] sm:$0xff]
    %v379 = vld [vmem:[#allocation8 + $0x4b0] sm:$0xff]
    %v380 = vld [vmem:[#allocation8 + $0x4b8] sm:$0xff]
    %v381 = vld [vmem:[#allocation8 + $0x4c0] sm:$0xff]
    %v382 = vld [vmem:[#allocation8 + $0x4c8] sm:$0xff]
    %v383 = vld [vmem:[#allocation8 + $0x4d0] sm:$0xff]
    %v384 = vld [vmem:[#allocation8 + $0x4d8] sm:$0xff]
    %v385 = vld [vmem:[#allocation8 + $0x4e0] sm:$0xff]
    %v386 = vld [vmem:[#allocation8 + $0x4e8] sm:$0xff]
    %v387 = vld [vmem:[#allocation8 + $0x4f0] sm:$0xff]
    %v388 = vld [vmem:[#allocation8 + $0x4f8] sm:$0xff]
    %v389 = vld [vmem:[#allocation8 + $0x500] sm:$0xff]
    %v390 = vld [vmem:[#allocation8 + $0x508] sm:$0xff]
    %v391 = vld [vmem:[#allocation8 + $0x510] sm:$0xff]
    %v392 = vld [vmem:[#allocation8 + $0x518] sm:$0xff]
    %v393 = vld [vmem:[#allocation8 + $0x520] sm:$0xff]
    %v394 = vld [vmem:[#allocation8 + $0x528] sm:$0xff]
    %v395 = vld [vmem:[#allocation8 + $0x530] sm:$0xff]
    %v396 = vld [vmem:[#allocation8 + $0x538] sm:$0xff]
    %v397 = vld [vmem:[#allocation8 + $0x540] sm:$0xff]
    %v398 = vld [vmem:[#allocation8 + $0x548] sm:$0xff]
    %v399 = vld [vmem:[#allocation8 + $0x550] sm:$0xff]
    %v400 = vld [vmem:[#allocation8 + $0x558] sm:$0xff]
    %v401 = vld [vmem:[#allocation8 + $0x560] sm:$0xff]
    %v402 = vld [vmem:[#allocation8 + $0x568] sm:$0xff]
    %v403 = vld [vmem:[#allocation8 + $0x570] sm:$0xff]
    %v404 = vld [vmem:[#allocation8 + $0x578] sm:$0xff]
    %v405 = vld [vmem:[#allocation8 + $0x580] sm:$0xff]
    %v406 = vld [vmem:[#allocation8 + $0x588] sm:$0xff]
    %v407 = vld [vmem:[#allocation8 + $0x590] sm:$0xff]
    %v408 = vld [vmem:[#allocation8 + $0x598] sm:$0xff]
    %v409 = vld [vmem:[#allocation8 + $0x5a0] sm:$0xff]
    %v410 = vld [vmem:[#allocation8 + $0x5a8] sm:$0xff]
    %v411 = vld [vmem:[#allocation8 + $0x5b0] sm:$0xff]
    %v412 = vld [vmem:[#allocation8 + $0x5b8] sm:$0xff]
    %v413 = vld [vmem:[#allocation8 + $0x5c0] sm:$0xff]
    %v414 = vld [vmem:[#allocation8 + $0x5c8] sm:$0xff]
    %v415 = vld [vmem:[#allocation8 + $0x5d0] sm:$0xff]
    %v416 = vld [vmem:[#allocation8 + $0x5d8] sm:$0xff]
    %v417 = vld [vmem:[#allocation8 + $0x5e0] sm:$0xff]
    %v418 = vld [vmem:[#allocation8 + $0x5e8] sm:$0xff]
    %v419 = vld [vmem:[#allocation8 + $0x5f0] sm:$0xff]
    %v420 = vld [vmem:[#allocation8 + $0x5f8] sm:$0xff]
    %v421 = vld [vmem:[%s4] sm:$0x7]
    %v423 = vperm.slane %v421, 0
    %v424 = vperm.slane %v421, 1
    %v425 = vperm.slane %v421, 2
    %429 = vmatpush.msra.mxu0 %v274
    %430 = vmatpush.msra.mxu0 %v271
    %431 = vmatpush.msra.mxu0 %v268
    %432 = vmatpush.msra.mxu0 %v265
    %433 = vmatpush.msra.mxu0 %v262
    %434 = vmatpush.msra.mxu0 %v259
    %435 = vmatpush.msra.mxu0 %v256
    %436 = vmatpush.msra.mxu0 %v253
    %437 = vmatpush.msra.mxu0 %v250
    %438 = vmatpush.msra.mxu0 %v247
    %439 = vmatpush.msra.mxu0 %v244
    %440 = vmatpush.msra.mxu0 %v241
    %441 = vmatpush.msra.mxu0 %v238
    %442 = vmatpush.msra.mxu0 %v235
    %443 = vmatpush.msra.mxu0 %v232
    %444 = vmatpush.msra.mxu0 %v229
    %445 = vmatmul.f32.gmra.mxu0 %v225
    %v446 = vpop.f32.mrf.mxu0
    %v447 = vadd.f32 %v423, %v446
    %448 = vdwg.mxu0
    %449 = vmatpush.msra.mxu0 %v322
    %450 = vmatpush.msra.mxu0 %v319
    %451 = vmatpush.msra.mxu0 %v316
    %452 = vmatpush.msra.mxu0 %v313
    %453 = vmatpush.msra.mxu0 %v310
    %454 = vmatpush.msra.mxu0 %v307
    %455 = vmatpush.msra.mxu0 %v304
    %456 = vmatpush.msra.mxu0 %v301
    %457 = vmatpush.msra.mxu0 %v298
    %458 = vmatpush.msra.mxu0 %v295
    %459 = vmatpush.msra.mxu0 %v292
    %460 = vmatpush.msra.mxu0 %v289
    %461 = vmatpush.msra.mxu0 %v286
    %462 = vmatpush.msra.mxu0 %v283
    %463 = vmatpush.msra.mxu0 %v280
    %464 = vmatpush.msra.mxu0 %v277
    %465 = vmatmul.f32.gmra.mxu0 %v226
    %v466 = vpop.f32.mrf.mxu0
    %v467 = vadd.f32 %v447, %v466
    %468 = vdwg.mxu0
    %469 = vmatpush.msra.mxu0 %v370
    %470 = vmatpush.msra.mxu0 %v367
    %471 = vmatpush.msra.mxu0 %v364
    %472 = vmatpush.msra.mxu0 %v361
    %473 = vmatpush.msra.mxu0 %v358
    %474 = vmatpush.msra.mxu0 %v355
    %475 = vmatpush.msra.mxu0 %v352
    %476 = vmatpush.msra.mxu0 %v349
    %477 = vmatpush.msra.mxu0 %v346
    %478 = vmatpush.msra.mxu0 %v343
    %479 = vmatpush.msra.mxu0 %v340
    %480 = vmatpush.msra.mxu0 %v337
    %481 = vmatpush.msra.mxu0 %v334
    %482 = vmatpush.msra.mxu0 %v331
    %483 = vmatpush.msra.mxu0 %v328
    %484 = vmatpush.msra.mxu0 %v325
    %485 = vmatmul.f32.gmra.mxu0 %v227
    %v486 = vpop.f32.mrf.mxu0
    %v487 = vadd.f32 %v467, %v486
    %488 = vdwg.mxu0
    %489 = vmatpush.msra.mxu0 %v418
    %490 = vmatpush.msra.mxu0 %v415
    %491 = vmatpush.msra.mxu0 %v412
    %492 = vmatpush.msra.mxu0 %v409
    %493 = vmatpush.msra.mxu0 %v406
    %494 = vmatpush.msra.mxu0 %v403
    %495 = vmatpush.msra.mxu0 %v400
    %496 = vmatpush.msra.mxu0 %v397
    %497 = vmatpush.msra.mxu0 %v394
    %498 = vmatpush.msra.mxu0 %v391
    %499 = vmatpush.msra.mxu0 %v388
    %500 = vmatpush.msra.mxu0 %v385
    %501 = vmatpush.msra.mxu0 %v382
    %502 = vmatpush.msra.mxu0 %v379
    %503 = vmatpush.msra.mxu0 %v376
    %504 = vmatpush.msra.mxu0 %v373
    %505 = vmatmul.f32.gmra.mxu0 %v228
    %v506 = vpop.f32.mrf.mxu0
    %v507 = vadd.f32 %v487, %v506
    %508 = vdwg.mxu0
    %509 = vmatpush.msra.mxu0 %v275
    %510 = vmatpush.msra.mxu0 %v272
    %511 = vmatpush.msra.mxu0 %v269
    %512 = vmatpush.msra.mxu0 %v266
    %513 = vmatpush.msra.mxu0 %v263
    %514 = vmatpush.msra.mxu0 %v260
    %515 = vmatpush.msra.mxu0 %v257
    %516 = vmatpush.msra.mxu0 %v254
    %517 = vmatpush.msra.mxu0 %v251
    %518 = vmatpush.msra.mxu0 %v248
    %519 = vmatpush.msra.mxu0 %v245
    %520 = vmatpush.msra.mxu0 %v242
    %521 = vmatpush.msra.mxu0 %v239
    %522 = vmatpush.msra.mxu0 %v236
    %523 = vmatpush.msra.mxu0 %v233
    %524 = vmatpush.msra.mxu0 %v230
    %525 = vmatmul.f32.gmra.mxu0 %v225
    %v526 = vpop.f32.mrf.mxu0
    %v527 = vadd.f32 %v424, %v526
    %528 = vdwg.mxu0
    %529 = vmatpush.msra.mxu0 %v323
    %530 = vmatpush.msra.mxu0 %v320
    %531 = vmatpush.msra.mxu0 %v317
    %532 = vmatpush.msra.mxu0 %v314
    %533 = vmatpush.msra.mxu0 %v311
    %534 = vmatpush.msra.mxu0 %v308
    %535 = vmatpush.msra.mxu0 %v305
    %536 = vmatpush.msra.mxu0 %v302
    %537 = vmatpush.msra.mxu0 %v299
    %538 = vmatpush.msra.mxu0 %v296
    %539 = vmatpush.msra.mxu0 %v293
    %540 = vmatpush.msra.mxu0 %v290
    %541 = vmatpush.msra.mxu0 %v287
    %542 = vmatpush.msra.mxu0 %v284
    %543 = vmatpush.msra.mxu0 %v281
    %544 = vmatpush.msra.mxu0 %v278
    %545 = vmatmul.f32.gmra.mxu0 %v226
    %v546 = vpop.f32.mrf.mxu0
    %v547 = vadd.f32 %v527, %v546
    %548 = vdwg.mxu0
    %549 = vmatpush.msra.mxu0 %v371
    %550 = vmatpush.msra.mxu0 %v368
    %551 = vmatpush.msra.mxu0 %v365
    %552 = vmatpush.msra.mxu0 %v362
    %553 = vmatpush.msra.mxu0 %v359
    %554 = vmatpush.msra.mxu0 %v356
    %555 = vmatpush.msra.mxu0 %v353
    %556 = vmatpush.msra.mxu0 %v350
    %557 = vmatpush.msra.mxu0 %v347
    %558 = vmatpush.msra.mxu0 %v344
    %559 = vmatpush.msra.mxu0 %v341
    %560 = vmatpush.msra.mxu0 %v338
    %561 = vmatpush.msra.mxu0 %v335
    %562 = vmatpush.msra.mxu0 %v332
    %563 = vmatpush.msra.mxu0 %v329
    %564 = vmatpush.msra.mxu0 %v326
    %565 = vmatmul.f32.gmra.mxu0 %v227
    %v566 = vpop.f32.mrf.mxu0
    %v567 = vadd.f32 %v547, %v566
    %568 = vdwg.mxu0
    %569 = vmatpush.msra.mxu0 %v419
    %570 = vmatpush.msra.mxu0 %v416
    %571 = vmatpush.msra.mxu0 %v413
    %572 = vmatpush.msra.mxu0 %v410
    %573 = vmatpush.msra.mxu0 %v407
    %574 = vmatpush.msra.mxu0 %v404
    %575 = vmatpush.msra.mxu0 %v401
    %576 = vmatpush.msra.mxu0 %v398
    %577 = vmatpush.msra.mxu0 %v395
    %578 = vmatpush.msra.mxu0 %v392
    %579 = vmatpush.msra.mxu0 %v389
    %580 = vmatpush.msra.mxu0 %v386
    %581 = vmatpush.msra.mxu0 %v383
    %582 = vmatpush.msra.mxu0 %v380
    %583 = vmatpush.msra.mxu0 %v377
    %584 = vmatpush.msra.mxu0 %v374
    %585 = vmatmul.f32.gmra.mxu0 %v228
    %v586 = vpop.f32.mrf.mxu0
    %v587 = vadd.f32 %v567, %v586
    %588 = vdwg.mxu0
    %589 = vmatpush.msra.mxu0 %v276
    %590 = vmatpush.msra.mxu0 %v273
    %591 = vmatpush.msra.mxu0 %v270
    %592 = vmatpush.msra.mxu0 %v267
    %593 = vmatpush.msra.mxu0 %v264
    %594 = vmatpush.msra.mxu0 %v261
    %595 = vmatpush.msra.mxu0 %v258
    %596 = vmatpush.msra.mxu0 %v255
    %597 = vmatpush.msra.mxu0 %v252
    %598 = vmatpush.msra.mxu0 %v249
    %599 = vmatpush.msra.mxu0 %v246
    %600 = vmatpush.msra.mxu0 %v243
    %601 = vmatpush.msra.mxu0 %v240
    %602 = vmatpush.msra.mxu0 %v237
    %603 = vmatpush.msra.mxu0 %v234
    %604 = vmatpush.msra.mxu0 %v231
    %605 = vmatmul.f32.gmra.mxu0 %v225
    %v606 = vpop.f32.mrf.mxu0
    %v607 = vadd.f32 %v425, %v606
    %608 = vdwg.mxu0
    %609 = vmatpush.msra.mxu0 %v324
    %610 = vmatpush.msra.mxu0 %v321
    %611 = vmatpush.msra.mxu0 %v318
    %612 = vmatpush.msra.mxu0 %v315
    %613 = vmatpush.msra.mxu0 %v312
    %614 = vmatpush.msra.mxu0 %v309
    %615 = vmatpush.msra.mxu0 %v306
    %616 = vmatpush.msra.mxu0 %v303
    %617 = vmatpush.msra.mxu0 %v300
    %618 = vmatpush.msra.mxu0 %v297
    %619 = vmatpush.msra.mxu0 %v294
    %620 = vmatpush.msra.mxu0 %v291
    %621 = vmatpush.msra.mxu0 %v288
    %622 = vmatpush.msra.mxu0 %v285
    %623 = vmatpush.msra.mxu0 %v282
    %624 = vmatpush.msra.mxu0 %v279
    %625 = vmatmul.f32.gmra.mxu0 %v226
    %v626 = vpop.f32.mrf.mxu0
    %v627 = vadd.f32 %v607, %v626
    %628 = vdwg.mxu0
    %629 = vmatpush.msra.mxu0 %v372
    %630 = vmatpush.msra.mxu0 %v369
    %631 = vmatpush.msra.mxu0 %v366
    %632 = vmatpush.msra.mxu0 %v363
    %633 = vmatpush.msra.mxu0 %v360
    %634 = vmatpush.msra.mxu0 %v357
    %635 = vmatpush.msra.mxu0 %v354
    %636 = vmatpush.msra.mxu0 %v351
    %637 = vmatpush.msra.mxu0 %v348
    %638 = vmatpush.msra.mxu0 %v345
    %639 = vmatpush.msra.mxu0 %v342
    %640 = vmatpush.msra.mxu0 %v339
    %641 = vmatpush.msra.mxu0 %v336
    %642 = vmatpush.msra.mxu0 %v333
    %643 = vmatpush.msra.mxu0 %v330
    %644 = vmatpush.msra.mxu0 %v327
    %645 = vmatmul.f32.gmra.mxu0 %v227
    %v646 = vpop.f32.mrf.mxu0
    %v647 = vadd.f32 %v627, %v646
    %648 = vdwg.mxu0
    %649 = vmatpush.msra.mxu0 %v420
    %650 = vmatpush.msra.mxu0 %v417
    %651 = vmatpush.msra.mxu0 %v414
    %652 = vmatpush.msra.mxu0 %v411
    %653 = vmatpush.msra.mxu0 %v408
    %654 = vmatpush.msra.mxu0 %v405
    %655 = vmatpush.msra.mxu0 %v402
    %656 = vmatpush.msra.mxu0 %v399
    %657 = vmatpush.msra.mxu0 %v396
    %658 = vmatpush.msra.mxu0 %v393
    %659 = vmatpush.msra.mxu0 %v390
    %660 = vmatpush.msra.mxu0 %v387
    %661 = vmatpush.msra.mxu0 %v384
    %662 = vmatpush.msra.mxu0 %v381
    %663 = vmatpush.msra.mxu0 %v378
    %664 = vmatpush.msra.mxu0 %v375
    %665 = vmatmul.f32.gmra.mxu0 %v228
    %v666 = vpop.f32.mrf.mxu0
    %v667 = vadd.f32 %v647, %v666
    %668 = vdwg.mxu0
    %v669 = vmax.f32 %v507, 0.0
    %v670 = vmax.f32 %v587, 0.0
    %v671 = vmax.f32 %v667, 0.0
    %v672 = vld [vmem:[#allocation10] sm:$0xff]
    %v673 = vld [vmem:[#allocation10 + $0x8] sm:$0xff]
    %v674 = vld [vmem:[#allocation10 + $0x10] sm:$0xff]
    %v675 = vld [vmem:[#allocation10 + $0x18] sm:$0xff]
    %v676 = vld [vmem:[#allocation10 + $0x20] sm:$0xff]
    %v677 = vld [vmem:[#allocation10 + $0x28] sm:$0xff]
    %v678 = vld [vmem:[#allocation10 + $0x30] sm:$0xff]
    %v679 = vld [vmem:[#allocation10 + $0x38] sm:$0xff]
    %v680 = vld [vmem:[#allocation10 + $0x40] sm:$0xff]
    %v681 = vld [vmem:[#allocation10 + $0x48] sm:$0xff]
    %v682 = vld [vmem:[#allocation10 + $0x50] sm:$0xff]
    %v683 = vld [vmem:[#allocation10 + $0x58] sm:$0xff]
    %v684 = vld [vmem:[#allocation10 + $0x60] sm:$0xff]
    %v685 = vld [vmem:[#allocation10 + $0x68] sm:$0xff]
    %v686 = vld [vmem:[#allocation10 + $0x70] sm:$0xff]
    %v687 = vld [vmem:[#allocation10 + $0x78] sm:$0xff]
    %v688 = vld [vmem:[#allocation10 + $0x80] sm:$0xff]
    %v689 = vld [vmem:[#allocation10 + $0x88] sm:$0xff]
    %v690 = vld [vmem:[#allocation10 + $0x90] sm:$0xff]
    %v691 = vld [vmem:[#allocation10 + $0x98] sm:$0xff]
    %v692 = vld [vmem:[#allocation10 + $0xa0] sm:$0xff]
    %v693 = vld [vmem:[#allocation10 + $0xa8] sm:$0xff]
    %v694 = vld [vmem:[#allocation10 + $0xb0] sm:$0xff]
    %v695 = vld [vmem:[#allocation10 + $0xb8] sm:$0xff]
    %v696 = vld [vmem:[#allocation10 + $0xc0] sm:$0xff]
    %v697 = vld [vmem:[#allocation10 + $0xc8] sm:$0xff]
    %v698 = vld [vmem:[#allocation10 + $0xd0] sm:$0xff]
    %v699 = vld [vmem:[#allocation10 + $0xd8] sm:$0xff]
    %v700 = vld [vmem:[#allocation10 + $0xe0] sm:$0xff]
    %v701 = vld [vmem:[#allocation10 + $0xe8] sm:$0xff]
    %v702 = vld [vmem:[#allocation10 + $0xf0] sm:$0xff]
    %v703 = vld [vmem:[#allocation10 + $0xf8] sm:$0xff]
    %v704 = vld [vmem:[#allocation10 + $0x100] sm:$0xff]
    %v705 = vld [vmem:[#allocation10 + $0x108] sm:$0xff]
    %v706 = vld [vmem:[#allocation10 + $0x110] sm:$0xff]
    %v707 = vld [vmem:[#allocation10 + $0x118] sm:$0xff]
    %v708 = vld [vmem:[#allocation10 + $0x120] sm:$0xff]
    %v709 = vld [vmem:[#allocation10 + $0x128] sm:$0xff]
    %v710 = vld [vmem:[#allocation10 + $0x130] sm:$0xff]
    %v711 = vld [vmem:[#allocation10 + $0x138] sm:$0xff]
    %v712 = vld [vmem:[#allocation10 + $0x140] sm:$0xff]
    %v713 = vld [vmem:[#allocation10 + $0x148] sm:$0xff]
    %v714 = vld [vmem:[#allocation10 + $0x150] sm:$0xff]
    %v715 = vld [vmem:[#allocation10 + $0x158] sm:$0xff]
    %v716 = vld [vmem:[#allocation10 + $0x160] sm:$0xff]
    %v717 = vld [vmem:[#allocation10 + $0x168] sm:$0xff]
    %v718 = vld [vmem:[#allocation10 + $0x170] sm:$0xff]
    %v719 = vld [vmem:[#allocation10 + $0x178] sm:$0xff]
    %v720 = vld [vmem:[%s6] sm:$0x1]
    %v722 = vperm.slane %v720, 0
    %724 = vmatpush.msra.mxu0 %v687
    %725 = vmatpush.msra.mxu0 %v686
    %726 = vmatpush.msra.mxu0 %v685
    %727 = vmatpush.msra.mxu0 %v684
    %728 = vmatpush.msra.mxu0 %v683
    %729 = vmatpush.msra.mxu0 %v682
    %730 = vmatpush.msra.mxu0 %v681
    %731 = vmatpush.msra.mxu0 %v680
    %732 = vmatpush.msra.mxu0 %v679
    %733 = vmatpush.msra.mxu0 %v678
    %734 = vmatpush.msra.mxu0 %v677
    %735 = vmatpush.msra.mxu0 %v676
    %736 = vmatpush.msra.mxu0 %v675
    %737 = vmatpush.msra.mxu0 %v674
    %738 = vmatpush.msra.mxu0 %v673
    %739 = vmatpush.msra.mxu0 %v672
    %740 = vmatmul.f32.gmra.mxu0 %v669
    %v741 = vpop.f32.mrf.mxu0
    %v742 = vadd.f32 %v722, %v741
    %743 = vdwg.mxu0
    %744 = vmatpush.msra.mxu0 %v703
    %745 = vmatpush.msra.mxu0 %v702
    %746 = vmatpush.msra.mxu0 %v701
    %747 = vmatpush.msra.mxu0 %v700
    %748 = vmatpush.msra.mxu0 %v699
    %749 = vmatpush.msra.mxu0 %v698
    %750 = vmatpush.msra.mxu0 %v697
    %751 = vmatpush.msra.mxu0 %v696
    %752 = vmatpush.msra.mxu0 %v695
    %753 = vmatpush.msra.mxu0 %v694
    %754 = vmatpush.msra.mxu0 %v693
    %755 = vmatpush.msra.mxu0 %v692
    %756 = vmatpush.msra.mxu0 %v691
    %757 = vmatpush.msra.mxu0 %v690
    %758 = vmatpush.msra.mxu0 %v689
    %759 = vmatpush.msra.mxu0 %v688
    %760 = vmatmul.f32.gmra.mxu0 %v670
    %v761 = vpop.f32.mrf.mxu0
    %v762 = vadd.f32 %v742, %v761
    %763 = vdwg.mxu0
    %764 = vmatpush.msra.mxu0 %v719
    %765 = vmatpush.msra.mxu0 %v718
    %766 = vmatpush.msra.mxu0 %v717
    %767 = vmatpush.msra.mxu0 %v716
    %768 = vmatpush.msra.mxu0 %v715
    %769 = vmatpush.msra.mxu0 %v714
    %770 = vmatpush.msra.mxu0 %v713
    %771 = vmatpush.msra.mxu0 %v712
    %772 = vmatpush.msra.mxu0 %v711
    %773 = vmatpush.msra.mxu0 %v710
    %774 = vmatpush.msra.mxu0 %v709
    %775 = vmatpush.msra.mxu0 %v708
    %776 = vmatpush.msra.mxu0 %v707
    %777 = vmatpush.msra.mxu0 %v706
    %778 = vmatpush.msra.mxu0 %v705
    %779 = vmatpush.msra.mxu0 %v704
    %780 = vmatmul.f32.gmra.mxu0 %v671
    %v781 = vpop.f32.mrf.mxu0
    %v782 = vadd.f32 %v762, %v781
    %783 = vdwg.mxu0
    %784 = vst [vmem:[#allocation11] sm:$0xff] %v782
    // Predicated region
    $region50: #{tpu_custom_call.1} parent=1 // pred_check
      _
    $region51: #{tpu_custom_call.1} parent=1 // pred_check_branch
      %786 = sbr.rel (0) target = $region53
    $region52: #{tpu_custom_call.1} parent=1 // pred_region
      %788 = vsyncadd [#allocation4], 0
      %s790 = sshll.u32 [#allocation11], 4
      %s791 = int_to_ptr.vmem [resolvable:$true] %s790
      %s792 = sshll.u32 %s7, 4
      %s793 = int_to_ptr.hbm [resolvable:$true] %s792
      %795 = dma.vmem_to_hbm [thread:$0]  %s791, 128, %s793, [#allocation4]
    $region53: #{tpu_custom_call.1} parent=1 // pred_fallthru
      _
    // Predicated region
    $region54: #{tpu_custom_call.1} parent=1 // pred_check
      _
    $region55: #{tpu_custom_call.1} parent=1 // pred_check_branch
      %797 = sbr.rel (0) target = $region57
    $region56: #{tpu_custom_call.1} parent=1 // pred_region
      %799 = dma.done [#allocation4], 128
    $region57: #{tpu_custom_call.1} parent=1 // pred_fallthru
      _
    %800 = vsyncpa [#allocation3], 1
    %801 = vsyncpa [#allocation6], 1
    %802 = vsyncpa [#allocation9], 1
    %803 = vsyncpa [#allocation4], 1

</llo_original>
